<compile_context>
chip_gen: v7x
topology: tpu7x:2x2x1
jax: 0.10.0
libtpu: 0.0.40
codegen_flags: <defaults>
</compile_context>

<pallas_src>
import functools

import jax
import jax.numpy as jnp
from jax import lax
from jax.experimental import pallas as pl
from jax.experimental.pallas import tpu as pltpu


def _patch_embed_kernel(x_ref, w_ref, p_ref, o_ref, *, eps):
    """One (batch, spatial-tile) grid step.

    x_ref: (1, K, tm)  bf16/f32  patch pixels, K = C*2*2, spatial on lanes
    w_ref: (E, K)      bf16/f32  folded conv weight
    p_ref: (E, 3)      f32       packed [conv bias | LN gamma | LN beta]
    o_ref: (1, E, tm)  f32       channels-first output block
    """
    # Conv as matmul on the MXU: (E, K) @ (K, tm) -> (E, tm), f32 accumulation.
    y = jnp.dot(w_ref[...], x_ref[0, :, :], preferred_element_type=jnp.float32)
    y = y + p_ref[:, 0:1]                              # conv bias, bcast over lanes

    # channels_first LayerNorm over E (axis 0), biased variance, fused moments.
    u = jnp.mean(y, axis=0, keepdims=True)             # (1, tm)
    m2 = jnp.mean(y * y, axis=0, keepdims=True)        # (1, tm)
    s = jnp.maximum(m2 - u * u, 0.0)
    yn = (y - u) * lax.rsqrt(s + eps)
    out = p_ref[:, 1:2] * yn + p_ref[:, 2:3]           # gamma * yn + beta
    o_ref[0, :, :] = out.astype(o_ref.dtype)


def _choose_spatial_tile(mo, k, e, in_bytes, tm_target=1024, vmem_budget=24 << 20):
    """Pick the spatial (lane) tile size, padded spatial extent and VMEM need."""
    def vmem_need(tm):
        # double-buffered x/out blocks + resident weight/params (counted x2 to be
        # conservative about Pallas' buffering of constant-index blocks).
        return (2 * k * tm * in_bytes + 2 * e * tm * 4
                + 2 * e * k * in_bytes + 2 * e * 3 * 4)

    # Whole Ho*Wo row per batch when it fits: fewest grid steps, no padding.
    if vmem_need(mo) <= vmem_budget:
        return mo, mo, vmem_need(mo)

    # Otherwise: largest lane-dense (multiple-of-128) tile within the budget.
    tm_target = max(128, (tm_target // 128) * 128)
    tm = 128
    for cand in range(tm_target, 127, -128):
        if vmem_need(cand) <= vmem_budget:
            tm = cand
            break
    # Prefer a tile that divides Ho*Wo exactly (avoids a post-kernel slice copy).
    for cand in range(tm, 127, -128):
        if mo % cand == 0:
            tm = cand
            break
    mo_pad = ((mo + tm - 1) // tm) * tm
    return tm, mo_pad, vmem_need(tm)


def patch_embed_pallas(x, conv_w, conv_b, ln_w, ln_b, *, eps=1e-6,
                       tm_target=1024, compute_dtype=jnp.bfloat16):
    """x: (B, C, H, W).  conv_w: (E, C, 2, 2), conv_b/ln_w/ln_b: (E,).

    Returns (B, E, H//2, W//2) float32, matching PatchEmbed.forward (NCHW in/out).
    """
    B, C, H, W = x.shape
    E = conv_w.shape[0]
    assert H % 2 == 0 and W % 2 == 0
    Ho, Wo = H // 2, W // 2
    K = C * 4
    Mo = Ho * Wo

    in_bytes = jnp.dtype(compute_dtype).itemsize
    tm, Mo_pad, need = _choose_spatial_tile(Mo, K, E, in_bytes, tm_target)

    # --- glue: non-overlapping 2x2 patch extract, spatial-minor layout ----------
    # (B,C,H,W) -> (B,C,Ho,2,Wo,2) -> (B,C,2,2,Ho,Wo) -> (B, K, Mo).  The bf16 cast
    # fuses into this single copy.  K order is (c, kh, kw) to match the folded conv
    # weight; Mo order is (ho, wo) to match the flattened NCHW output.
    xp = x.astype(compute_dtype).reshape(B, C, Ho, 2, Wo, 2)
    xp = jnp.transpose(xp, (0, 1, 3, 5, 2, 4)).reshape(B, K, Mo)
    if Mo_pad != Mo:
        xp = jnp.pad(xp, ((0, 0), (0, 0), (0, Mo_pad - Mo)))

    w2 = conv_w.reshape(E, K).astype(compute_dtype)                       # (E, K)
    params = jnp.stack([conv_b, ln_w, ln_b], axis=1).astype(jnp.float32)  # (E, 3)

    grid = (B, Mo_pad // tm)
    vmem_limit = min(64 << 20, max(2 * need, 32 << 20))

    out = pl.pallas_call(
        functools.partial(_patch_embed_kernel, eps=eps),
        out_shape=jax.ShapeDtypeStruct((B, E, Mo_pad), jnp.float32),
        grid_spec=pltpu.PrefetchScalarGridSpec(
            num_scalar_prefetch=0,
            grid=grid,
            in_specs=[
                pl.BlockSpec((1, K, tm), lambda b, t: (b, 0, t)),   # patch pixels
                pl.BlockSpec((E, K), lambda b, t: (0, 0)),          # conv weight
                pl.BlockSpec((E, 3), lambda b, t: (0, 0)),          # bias|gamma|beta
            ],
            out_specs=pl.BlockSpec((1, E, tm), lambda b, t: (b, 0, t)),
        ),
        compiler_params=pltpu.CompilerParams(
            dimension_semantics=("parallel", "parallel"),
            vmem_limit_bytes=vmem_limit),
    )(xp, w2, params)

    if Mo_pad != Mo:
        out = out[:, :, :Mo]
    # Splitting the minor axis back into (Ho, Wo) is a free (view) reshape.
    return out.reshape(B, E, Ho, Wo)


def _reference(x, conv_w, conv_b, ln_w, ln_b, eps=1e-6):
    """Pure-JAX f32 reference mirroring the PyTorch forward (sanity check)."""
    y = lax.conv_general_dilated(
        x, conv_w, window_strides=(2, 2), padding="VALID",
        dimension_numbers=("NCHW", "OIHW", "NCHW"))
    y = y + conv_b[None, :, None, None]
    u = jnp.mean(y, axis=1, keepdims=True)
    s = jnp.mean((y - u) ** 2, axis=1, keepdims=True)
    yn = (y - u) / jnp.sqrt(s + eps)
    return ln_w[None, :, None, None] * yn + ln_b[None, :, None, None]


if __name__ == "__main__":
    B, C, H, W, E = 2, 4, 16, 16, 32

    key = jax.random.PRNGKey(0)
    kx, kw, kb, kg, kbeta = jax.random.split(key, 5)

    x = jax.random.normal(kx, (B, C, H, W), dtype=jnp.float32)
    # Synthetic parameters for Conv2d(C, E, kernel=2, stride=2) + LayerNorm(E).
    conv_w = 0.1 * jax.random.normal(kw, (E, C, 2, 2), dtype=jnp.float32)
    conv_b = 0.01 * jax.random.normal(kb, (E,), dtype=jnp.float32)
    ln_w = 1.0 + 0.1 * jax.random.normal(kg, (E,), dtype=jnp.float32)
    ln_b = 0.05 * jax.random.normal(kbeta, (E,), dtype=jnp.float32)

    out = patch_embed_pallas(x, conv_w, conv_b, ln_w, ln_b)
    out = jax.block_until_ready(out)

    ref = _reference(x, conv_w, conv_b, ln_w, ln_b)
    assert out.shape == (B, E, H // 2, W // 2), out.shape
    err = float(jnp.max(jnp.abs(out - ref)))
    # bf16 MXU inputs with f32 accumulation + f32 LayerNorm: error ~1e-3 level.
    assert err < 2e-2, err

    print("KERNEL_OK")
</pallas_src>

<mosaic_0001>
module attributes {stable_mosaic.version = 11 : i64} {
  func.func @_patch_embed_kernel(%arg0: i32, %arg1: i32, %arg2: memref<1x16x64xbf16, #tpu.memory_space<vmem>>, %arg3: memref<32x16xbf16, #tpu.memory_space<vmem>>, %arg4: memref<32x3xf32, #tpu.memory_space<vmem>>, %arg5: memref<1x32x64xf32, #tpu.memory_space<vmem>>) attributes {dimension_semantics = [#tpu.dimension_semantics<parallel>, #tpu.dimension_semantics<parallel>], iteration_bounds = array<i64: 2, 1>, scalar_prefetch = 0 : i64, scratch_operands = 0 : i64, tpu.core_type = #tpu.core_type<tc>, window_params = [{transform_indices = @transform_0, window_bounds = array<i64: 1, 16, 64>}, {pipeline_mode = #tpu.pipeline_mode<synchronous>, transform_indices = @transform_1, window_bounds = array<i64: 32, 16>}, {pipeline_mode = #tpu.pipeline_mode<synchronous>, transform_indices = @transform_2, window_bounds = array<i64: 32, 3>}, {transform_indices = @transform_3, window_bounds = array<i64: 1, 32, 64>}]} {
    %c0 = arith.constant 0 : index
    %c0_0 = arith.constant 0 : index
    %0 = vector.load %arg3[%c0, %c0_0] : memref<32x16xbf16, #tpu.memory_space<vmem>>, vector<32x16xbf16>
    %c0_1 = arith.constant 0 : index
    %c0_2 = arith.constant 0 : index
    %c0_3 = arith.constant 0 : index
    %1 = vector.load %arg2[%c0_1, %c0_2, %c0_3] : memref<1x16x64xbf16, #tpu.memory_space<vmem>>, vector<1x16x64xbf16>
    %2 = vector.shape_cast %1 : vector<1x16x64xbf16> to vector<16x64xbf16>
    %cst = arith.constant dense<0.000000e+00> : vector<32x64xf32>
    %3 = tpu.matmul %0, %2, %cst {dimension_numbers = #tpu.dot_dimension_numbers<[1], [0], [0], [1], [0, 0, 1, 1], [], []>} : vector<32x16xbf16>, vector<16x64xbf16>, vector<32x64xf32> -> vector<32x64xf32>
    %c0_4 = arith.constant 0 : index
    %c0_5 = arith.constant 0 : index
    %4 = vector.load %arg4[%c0_4, %c0_5] : memref<32x3xf32, #tpu.memory_space<vmem>>, vector<32x1xf32>
    %5 = vector.broadcast %4 : vector<32x1xf32> to vector<32x64xf32>
    %6 = arith.addf %3, %5 : vector<32x64xf32>
    %cst_6 = arith.constant dense<0.000000e+00> : vector<64xf32>
    %7 = vector.multi_reduction <add>, %6, %cst_6 [0] : vector<32x64xf32> to vector<64xf32>
    %8 = vector.shape_cast %7 : vector<64xf32> to vector<1x64xf32>
    %cst_7 = arith.constant 3.200000e+01 : f32
    %9 = vector.broadcast %cst_7 : f32 to vector<1x64xf32>
    %10 = arith.divf %8, %9 : vector<1x64xf32>
    %11 = arith.mulf %6, %6 : vector<32x64xf32>
    %cst_8 = arith.constant dense<0.000000e+00> : vector<64xf32>
    %12 = vector.multi_reduction <add>, %11, %cst_8 [0] : vector<32x64xf32> to vector<64xf32>
    %13 = vector.shape_cast %12 : vector<64xf32> to vector<1x64xf32>
    %cst_9 = arith.constant 3.200000e+01 : f32
    %14 = vector.broadcast %cst_9 : f32 to vector<1x64xf32>
    %15 = arith.divf %13, %14 : vector<1x64xf32>
    %16 = arith.mulf %10, %10 : vector<1x64xf32>
    %17 = arith.subf %15, %16 : vector<1x64xf32>
    %cst_10 = arith.constant 0.000000e+00 : f32
    %18 = vector.broadcast %cst_10 : f32 to vector<1x64xf32>
    %19 = arith.maximumf %17, %18 : vector<1x64xf32>
    %20 = vector.broadcast %10 : vector<1x64xf32> to vector<32x64xf32>
    %21 = arith.subf %6, %20 : vector<32x64xf32>
    %cst_11 = arith.constant 9.99999997E-7 : f32
    %22 = vector.broadcast %cst_11 : f32 to vector<1x64xf32>
    %23 = arith.addf %19, %22 : vector<1x64xf32>
    %24 = math.rsqrt %23 : vector<1x64xf32>
    %25 = vector.broadcast %24 : vector<1x64xf32> to vector<32x64xf32>
    %26 = arith.mulf %21, %25 : vector<32x64xf32>
    %c0_12 = arith.constant 0 : index
    %c1 = arith.constant 1 : index
    %27 = vector.load %arg4[%c0_12, %c1] : memref<32x3xf32, #tpu.memory_space<vmem>>, vector<32x1xf32>
    %28 = vector.broadcast %27 : vector<32x1xf32> to vector<32x64xf32>
    %29 = arith.mulf %28, %26 : vector<32x64xf32>
    %c0_13 = arith.constant 0 : index
    %c2 = arith.constant 2 : index
    %30 = vector.load %arg4[%c0_13, %c2] : memref<32x3xf32, #tpu.memory_space<vmem>>, vector<32x1xf32>
    %31 = vector.broadcast %30 : vector<32x1xf32> to vector<32x64xf32>
    %32 = arith.addf %29, %31 : vector<32x64xf32>
    %c0_14 = arith.constant 0 : index
    %c0_15 = arith.constant 0 : index
    %c0_16 = arith.constant 0 : index
    %33 = vector.load %arg5[%c0_14, %c0_15, %c0_16] : memref<1x32x64xf32, #tpu.memory_space<vmem>>, vector<1x32x64xf32>
    %34 = vector.shape_cast %33 : vector<1x32x64xf32> to vector<32x64xf32>
    %35 = vector.shape_cast %32 : vector<32x64xf32> to vector<1x32x64xf32>
    tpu.vector_store %arg5[%c0_14, %c0_15, %c0_16], %35 {strides = array<i32>} : memref<1x32x64xf32, #tpu.memory_space<vmem>>, vector<1x32x64xf32>,
    return
  }
  func.func @transform_0(%arg0: i32, %arg1: i32) -> (i32, i32, i32) {
    %c0_i32 = arith.constant 0 : i32
    %c0_i32_0 = arith.constant 0 : i32
    return %arg0, %c0_i32, %arg1 : i32, i32, i32
  }
  func.func @transform_1(%arg0: i32, %arg1: i32) -> (i32, i32) {
    %c0_i32 = arith.constant 0 : i32
    %c0_i32_0 = arith.constant 0 : i32
    %c0_i32_1 = arith.constant 0 : i32
    return %c0_i32, %c0_i32_0 : i32, i32
  }
  func.func @transform_2(%arg0: i32, %arg1: i32) -> (i32, i32) {
    %c0_i32 = arith.constant 0 : i32
    %c0_i32_0 = arith.constant 0 : i32
    %c0_i32_1 = arith.constant 0 : i32
    return %c0_i32, %c0_i32_0 : i32, i32
  }
  func.func @transform_3(%arg0: i32, %arg1: i32) -> (i32, i32, i32) {
    %c0_i32 = arith.constant 0 : i32
    %c0_i32_0 = arith.constant 0 : i32
    return %arg0, %c0_i32, %arg1 : i32, i32, i32
  }
}

</mosaic_0001>

<llo_original>
// kernel: tpu_custom_call.1
$region0: #{tpu_custom_call.1}
  #allocation0 [shape = 'u32[]', space=smem, size = 0x4, offset = 0x4, fixed_abs, tag = 'smem constant byte address 0x4 - core index']
  #allocation1 [shape = 'u32[144,128]{1,0:T(1,128)}', space=vmem, size = 0x12000, scoped, tag = 'internal scratch']
  %s0 = inlined_call_operand.vmem [shape: bf16[2,16,64], index: 0, kind: input, shape index: {}]
  %s1 = inlined_call_operand.vmem [shape: bf16[32,16], index: 1, kind: input, shape index: {}]
  %s2 = inlined_call_operand.vmem [shape: f32[32,3], index: 2, kind: input, shape index: {}]
  %s3 = inlined_call_operand.hbm [shape: f32[2,32,64], index: 3, kind: output, shape index: {}]
  %s4 = sld [smem:[#allocation0]]
  $region45: #{tpu_custom_call.1} parent=0
    _
  %s6 = ssub.s32 1, %s4
  %s7 = scalar_select 0, %s6, %s4
  $region1: #{tpu_custom_call.1} parent=0
    #allocation2 [shape = 'u8[32768]{0}', space=vmem, size = 0x8000, scoped, tag = 'output window, operand 0']
    #allocation3 [shape = 's32[2]{0}', space=sflag, size = 0x8, scoped, tag = 'scoped memory for tpu_custom_call.1']
    %8 = vsyncpa [#allocation3], 0
    %s9 = scalar_lea.sflag [#allocation3], 1
    %10 = vsyncpa %s9, 0
    loop: start=0, step=1, limit=4
    $region2: #{tpu_custom_call.1} parent=1 // loop_pre_header
      _
    $region3: #{tpu_custom_call.1} parent=1 // loop_header
      %s12 = sphi 0, %s16
      %p13 = scmp.ge.s32.totalorder %s12, 4
      %s19 = sphi 0, %s31
      %s20 = sphi 0, %s27
      %s21 = sphi 0, %s19
      %s22 = sphi 0, %s20
      %s23 = sphi 0, %s21
      %s24 = sphi 0, %s22
      %s36 = sphi 0, %s38
      %s39 = sphi 0, %s36
      %s40 = sphi 0, %s39
      %s56 = sphi 0, %s40
      %s60 = sphi 0, %s60
      %s62 = sphi 0, %s60
      %s63 = sphi 0, %s62
      %s77 = sphi 0, %s63
      %s81 = sphi 0, %s81
      %s83 = sphi 0, %s81
      %s84 = sphi 0, %s83
      %s98 = sphi 0, %s84
      %s106 = sphi 0, %s108
      %s109 = sphi 0, %s106
      %s110 = sphi 0, %s109
      %s126 = sphi 0, %s110
    $region4: #{tpu_custom_call.1} parent=1 // loop_header_branch
      %15 = sbr.rel (%p13) target = $region8
    $region5: #{tpu_custom_call.1} parent=1 // loop_body
      %s17 = ssub.s32 %s12, 1
      %s18 = ssub.s32 %s12, 2
      %s25 = sadd.s32 1, %s20
      %p26 = scmp.ge.s32.totalorder %s25, 1
      %s27 = scalar_select %p26, 0, %s25
      %s28 = sadd.s32 1, %s19
      %s29 = scalar_select %p26, %s28, %s19
      %p30 = scmp.ge.s32.totalorder %s29, 2
      %s31 = scalar_select %p30, 0, %s29
      %s32 = ssub.s32 %s19, %s31
      %s33 = ssub.s32 %s20, %s27
      %s34 = sor.u32 %s32, %s33
      %p35 = scmp.eq.s32.totalorder %s34, 0
      %s37 = sadd.s32 %s36, 1
      %s38 = scalar_select %p35, %s36, %s37
      %p41 = pneg %p35
      %p42 = scmp.eq.s32.totalorder %s12, 1
      %p43 = por %p41, %p42
      %p44 = scmp.ne.s32.totalorder %s36, %s39
      %p45 = scmp.eq.s32.totalorder %s12, 0
      %p46 = por %p44, %p45
      %p47 = scmp.ne.s32.totalorder %s36, %s39
      %p48 = scmp.eq.s32.totalorder %s17, 1
      %p49 = por %p47, %p48
      %p50 = scmp.ne.s32.totalorder %s39, %s40
      %p51 = scmp.eq.s32.totalorder %s17, 0
      %p52 = por %p50, %p51
      %p53 = scmp.ne.s32.totalorder %s39, %s40
      %p54 = scmp.eq.s32.totalorder %s18, 1
      %p55 = por %p53, %p54
      %p57 = scmp.ne.s32.totalorder %s40, %s56
      %p58 = scmp.eq.s32.totalorder %s18, 0
      %p59 = por %p57, %p58
      %s61 = sadd.s32 %s60, 1
      %p64 = scmp.eq.s32.totalorder %s12, 1
      %p65 = scmp.ne.s32.totalorder %s60, %s62
      %p66 = scmp.eq.s32.totalorder %s12, 0
      %p67 = por %p65, %p66
      %p68 = scmp.ne.s32.totalorder %s60, %s62
      %p69 = scmp.eq.s32.totalorder %s17, 1
      %p70 = por %p68, %p69
      %p71 = scmp.ne.s32.totalorder %s62, %s63
      %p72 = scmp.eq.s32.totalorder %s17, 0
      %p73 = por %p71, %p72
      %p74 = scmp.ne.s32.totalorder %s62, %s63
      %p75 = scmp.eq.s32.totalorder %s18, 1
      %p76 = por %p74, %p75
      %p78 = scmp.ne.s32.totalorder %s63, %s77
      %p79 = scmp.eq.s32.totalorder %s18, 0
      %p80 = por %p78, %p79
      %s82 = sadd.s32 %s81, 1
      %p85 = scmp.eq.s32.totalorder %s12, 1
      %p86 = scmp.ne.s32.totalorder %s81, %s83
      %p87 = scmp.eq.s32.totalorder %s12, 0
      %p88 = por %p86, %p87
      %p89 = scmp.ne.s32.totalorder %s81, %s83
      %p90 = scmp.eq.s32.totalorder %s17, 1
      %p91 = por %p89, %p90
      %p92 = scmp.ne.s32.totalorder %s83, %s84
      %p93 = scmp.eq.s32.totalorder %s17, 0
      %p94 = por %p92, %p93
      %p95 = scmp.ne.s32.totalorder %s83, %s84
      %p96 = scmp.eq.s32.totalorder %s18, 1
      %p97 = por %p95, %p96
      %p99 = scmp.ne.s32.totalorder %s84, %s98
      %p100 = scmp.eq.s32.totalorder %s18, 0
      %p101 = por %p99, %p100
      %s102 = ssub.s32 %s19, %s31
      %s103 = ssub.s32 %s20, %s27
      %s104 = sor.u32 %s102, %s103
      %p105 = scmp.eq.s32.totalorder %s104, 0
      %s107 = sadd.s32 %s106, 1
      %s108 = scalar_select %p105, %s106, %s107
      %p111 = pneg %p105
      %p112 = scmp.eq.s32.totalorder %s12, 1
      %p113 = por %p111, %p112
      %p114 = scmp.ne.s32.totalorder %s106, %s109
      %p115 = scmp.eq.s32.totalorder %s12, 0
      %p116 = por %p114, %p115
      %p117 = scmp.ne.s32.totalorder %s106, %s109
      %p118 = scmp.eq.s32.totalorder %s17, 1
      %p119 = por %p117, %p118
      %p120 = scmp.ne.s32.totalorder %s109, %s110
      %p121 = scmp.eq.s32.totalorder %s17, 0
      %p122 = por %p120, %p121
      %p123 = scmp.ne.s32.totalorder %s109, %s110
      %p124 = scmp.eq.s32.totalorder %s18, 1
      %p125 = por %p123, %p124
      %p127 = scmp.ne.s32.totalorder %s110, %s126
      %p128 = scmp.eq.s32.totalorder %s18, 0
      %p129 = por %p127, %p128
      %p130 = scmp.le.s32.totalorder 1, %s12
      %p131 = scmp.lt.s32.totalorder %s12, 3
      %p132 = pnand %p130, %p131
      %p133 = pneg %p132
      // Predicated region
      $region9: #{tpu_custom_call.1} parent=5 // pred_check
        _
      $region10: #{tpu_custom_call.1} parent=5 // pred_check_branch
        %135 = sbr.rel (%p132) target = $region12
      $region11: #{tpu_custom_call.1} parent=5 // pred_region
        %s136 = ssub.s32 %s12, 1
        // Predicated region
        $region13: #{tpu_custom_call.1} parent=11 // pred_check
          %p137 = pneg %p73
        $region14: #{tpu_custom_call.1} parent=11 // pred_check_branch
          %139 = sbr.rel (%p137) target = $region16
        $region15: #{tpu_custom_call.1} parent=11 // pred_region
          _
        $region16: #{tpu_custom_call.1} parent=11 // pred_fallthru
          _
        // Predicated region
        $region17: #{tpu_custom_call.1} parent=11 // pred_check
          %p140 = pneg %p94
        $region18: #{tpu_custom_call.1} parent=11 // pred_check_branch
          %142 = sbr.rel (%p140) target = $region20
        $region19: #{tpu_custom_call.1} parent=11 // pred_region
          _
        $region20: #{tpu_custom_call.1} parent=11 // pred_fallthru
          _
      $region12: #{tpu_custom_call.1} parent=5 // pred_fallthru
        _
      %p143 = scmp.lt.s32.totalorder %s12, 2
      // Predicated region
      $region21: #{tpu_custom_call.1} parent=5 // pred_check
        %p144 = pneg %p143
      $region22: #{tpu_custom_call.1} parent=5 // pred_check_branch
        %146 = sbr.rel (%p144) target = $region24
      $region23: #{tpu_custom_call.1} parent=5 // pred_region
        // Predicated region
        $region25: #{tpu_custom_call.1} parent=23 // pred_check
          %p147 = pneg %p46
        $region26: #{tpu_custom_call.1} parent=23 // pred_check_branch
          %149 = sbr.rel (%p147) target = $region28
        $region27: #{tpu_custom_call.1} parent=23 // pred_region
          %p150 = scmp.lt.s32.totalorder %s19, 1
          %s151 = scalar_select %p150, %s19, 1
          %p152 = scmp.lt.s32.totalorder %s20, 0
          %s153 = scalar_select %p152, %s20, 0
          %s154 = smul.addr %s151, 2
          %s155 = sadd.s32 %s153, %s154
          %s156 = smul.addr %s155, 4
          %s157 = scalar_lea.vmem %s0, %s156
        $region28: #{tpu_custom_call.1} parent=23 // pred_fallthru
          _
      $region24: #{tpu_custom_call.1} parent=5 // pred_fallthru
        _
      %p158 = scmp.le.s32.totalorder 1, %s12
      %p159 = scmp.lt.s32.totalorder %s12, 3
      %p160 = pnand %p158, %p159
      %p161 = pneg %p160
      // Predicated region
      $region29: #{tpu_custom_call.1} parent=5 // pred_check
        _
      $region30: #{tpu_custom_call.1} parent=5 // pred_check_branch
        %163 = sbr.rel (%p160) target = $region32
      $region31: #{tpu_custom_call.1} parent=5 // pred_region
        %s164 = ssub.s32 %s12, 1
        %p165 = scmp.lt.s32.totalorder %s21, 1
        %s166 = scalar_select %p165, %s21, 1
        %p167 = scmp.lt.s32.totalorder %s22, 0
        %s168 = scalar_select %p167, %s22, 0
        %s169 = smul.addr %s166, 2
        %s170 = sadd.s32 %s168, %s169
        %s171 = smul.addr %s170, 4
        %s172 = scalar_lea.vmem %s0, %s171
        %p173 = pneg %p52
        %p174 = pneg %p49
        %p175 = pneg %p73
        %p176 = pneg %p70
        %p177 = pneg %p94
        %p178 = pneg %p91
        %p179 = pneg %p122
        %p180 = pneg %p119
        %s181 = sand.u32 %s109, 1
        %s182 = scalar_lea.sflag [#allocation3], %s181
        %s183 = sand.u32 %s109, 1
        %s184 = smul.addr %s183, 32
        %s185 = scalar_lea.vmem [#allocation2], %s184
        %p186 = scmp.lt.s32.totalorder %s21, 1
        %s187 = scalar_select %p186, %s21, 1
        %p188 = scmp.lt.s32.totalorder %s22, 0
        %s189 = scalar_select %p188, %s22, 0
        %s190 = smul.addr %s187, 2
        %s191 = sadd.s32 %s189, %s190
        %s192 = smul.addr %s191, 4
        %s193 = scalar_lea.vmem %s0, %s192
        %v195 = vld [vmem:[%s1] sm:$0xf]
        %v196 = vld [vmem:[%s1 + $0x4] sm:$0xf]
        %v197 = vld [vmem:[%s1 + $0x8] sm:$0xf]
        %v198 = vld [vmem:[%s1 + $0xc] sm:$0xf]
        %v199 = vld [vmem:[%s193] sm:$0xf]
        %v200 = vld [vmem:[%s193 + $0x4] sm:$0xf]
        %v201 = vld [vmem:[%s2] sm:$0xff]
        %v202 = vld [vmem:[%s2 + $0x8] sm:$0xff]
        %v203 = vld [vmem:[%s2 + $0x10] sm:$0xff]
        %v204 = vld [vmem:[%s2 + $0x18] sm:$0xff]
        %206 = vset.pattern.permute.xlu0 0
        %207 = vperm.xlu0 %206, %v201
        %v208 = vpop.permute.xlu0 %207
        %211 = vset.pattern.permute.xlu0 0
        %212 = vperm.xlu0 %211, %v202
        %v213 = vpop.permute.xlu0 %212
        %216 = vset.pattern.permute.xlu0 0
        %217 = vperm.xlu0 %216, %v203
        %v218 = vpop.permute.xlu0 %217
        %221 = vset.pattern.permute.xlu0 0
        %222 = vperm.xlu0 %221, %v204
        %v223 = vpop.permute.xlu0 %222
        %v229 = vunpack.c.l.b16 %v195
        %v230 = vunpack.c.l.b16 %v196
        %v231 = vunpack.c.l.b16 %v197
        %v232 = vunpack.c.l.b16 %v198
        %v233 = vpack.c.b16 %v230, %v229
        %v234 = vpack.c.b16 %v232, %v231
        %v237 = vunpack.c.l.b16 %v199
        %v238 = vunpack.c.l.b16 %v200
        %v239 = vpack.c.b16 %v238, %v237
        %vm241 = vcmask 130048
        %v243 = vsel %vm241, %v233, 0
        %v246 = vsel %vm241, %v234, 0
        %248 = vmatprep.subr.bf16.mxu0 0
        %249 = vmatpush1.bf16.msra.mxu0 %v239
        %250 = vmatprep.subr.bf16.mxu0 0
        %251 = vmatpush1.bf16.msra.mxu0 0
        %252 = vmatprep.subr.bf16.mxu0 0
        %253 = vmatpush1.bf16.msra.mxu0 0
        %254 = vmatprep.subr.bf16.mxu0 0
        %255 = vmatpush1.bf16.msra.mxu0 0
        %256 = vmatprep.subr.bf16.mxu0 0
        %257 = vmatpush1.bf16.msra.mxu0 0
        %258 = vmatprep.subr.bf16.mxu0 0
        %259 = vmatpush1.bf16.msra.mxu0 0
        %260 = vmatprep.subr.bf16.mxu0 0
        %261 = vmatpush1.bf16.msra.mxu0 0
        %262 = vmatprep.subr.bf16.mxu0 0
        %263 = vmatpush1.bf16.msra.mxu0 0
        %264 = vmatprep.subr.bf16.mxu0 0
        %265 = vmatpush1.bf16.msra.mxu0 0
        %266 = vmatprep.subr.bf16.mxu0 0
        %267 = vmatpush1.bf16.msra.mxu0 0
        %268 = vmatprep.subr.bf16.mxu0 0
        %269 = vmatpush1.bf16.msra.mxu0 0
        %270 = vmatprep.subr.bf16.mxu0 0
        %271 = vmatpush1.bf16.msra.mxu0 0
        %272 = vmatprep.subr.bf16.mxu0 0
        %273 = vmatpush1.bf16.msra.mxu0 0
        %274 = vmatprep.subr.bf16.mxu0 0
        %275 = vmatpush1.bf16.msra.mxu0 0
        %276 = vmatprep.subr.bf16.mxu0 0
        %277 = vmatpush1.bf16.msra.mxu0 0
        %278 = vmatprep.subr.bf16.mxu0 0
        %279 = vmatpush1.bf16.msra.mxu0 0
        %280 = vmatprep.mubr.bf16.mxu0 0
        %281 = vmatmul.mubr.bf16.gmra.mrb[0].mxu0 %v243
        %v282 = vpop.f32.mrb[0].mxu0
        %v283 = vadd.f32 %v208, %v282
        %v284 = vpop.f32.mrb[0].mxu0
        %v285 = vpop.f32.mrb[0].mxu0
        %v286 = vadd.f32 %v213, %v285
        %v287 = vpop.f32.mrb[0].mxu0
        %288 = vmatprep.mubr.bf16.mxu0 0
        %289 = vmatmul.mubr.bf16.gmra.mrb[0].mxu0 %v246
        %v290 = vpop.f32.mrb[0].mxu0
        %v291 = vadd.f32 %v218, %v290
        %v292 = vpop.f32.mrb[0].mxu0
        %v293 = vpop.f32.mrb[0].mxu0
        %v294 = vadd.f32 %v223, %v293
        %v295 = vpop.f32.mrb[0].mxu0
        %296 = vdwg.mxu0
        %vm297 = vcmask 523264
        %v298 = vsel %vm297, %v283, 0.0
        %v299 = vsel %vm297, %v286, 0.0
        %v300 = vadd.f32 %v298, %v299
        %v301 = vsel %vm297, %v291, 0.0
        %v302 = vadd.f32 %v300, %v301
        %v303 = vsel %vm297, %v294, 0.0
        %v304 = vadd.f32 %v302, %v303
        %v305 = vrot.slane %v304, 4
        %v306 = vadd.f32 %v304, %v305
        %v307 = vrot.slane %v306, 2
        %v308 = vadd.f32 %v306, %v307
        %v309 = vrot.slane %v308, 1
        %v310 = vadd.f32 %v308, %v309
        %v311 = vrcp.pop 32.0
        %v312 = vmul.f32 %v310, %v311
        %v313 = vmul.f32 %v283, %v283
        %v314 = vmul.f32 %v286, %v286
        %v315 = vmul.f32 %v291, %v291
        %v316 = vmul.f32 %v294, %v294
        %v317 = vsel %vm297, %v313, 0.0
        %v318 = vsel %vm297, %v314, 0.0
        %v319 = vadd.f32 %v317, %v318
        %v320 = vsel %vm297, %v315, 0.0
        %v321 = vadd.f32 %v319, %v320
        %v322 = vsel %vm297, %v316, 0.0
        %v323 = vadd.f32 %v321, %v322
        %v324 = vrot.slane %v323, 4
        %v325 = vadd.f32 %v323, %v324
        %v326 = vrot.slane %v325, 2
        %v327 = vadd.f32 %v325, %v326
        %v328 = vrot.slane %v327, 1
        %v329 = vadd.f32 %v327, %v328
        %v330 = vmul.f32 %v329, %v311
        %v331 = vmul.f32 %v312, %v312
        %v332 = vsub.f32 %v330, %v331
        %v333 = vmax.f32 %v332, 0.0
        %v334 = vsub.f32 %v283, %v312
        %v335 = vsub.f32 %v286, %v312
        %v336 = vsub.f32 %v291, %v312
        %v337 = vsub.f32 %v294, %v312
        %v338 = vadd.f32 %v333, 1e-06
        %v339 = vrsqrt.pop %v338
        %v340 = vmul.f32 %v334, %v339
        %v341 = vmul.f32 %v335, %v339
        %v342 = vmul.f32 %v336, %v339
        %v343 = vmul.f32 %v337, %v339
        %344 = vset.pattern.permute.xlu0 1
        %345 = vperm.xlu0 %344, %v201
        %v346 = vpop.permute.xlu0 %345
        %348 = vset.pattern.permute.xlu0 1
        %349 = vperm.xlu0 %348, %v202
        %v350 = vpop.permute.xlu0 %349
        %352 = vset.pattern.permute.xlu0 1
        %353 = vperm.xlu0 %352, %v203
        %v354 = vpop.permute.xlu0 %353
        %356 = vset.pattern.permute.xlu0 1
        %357 = vperm.xlu0 %356, %v204
        %v358 = vpop.permute.xlu0 %357
        %v360 = vmul.f32 %v346, %v340
        %v361 = vmul.f32 %v350, %v341
        %v362 = vmul.f32 %v354, %v342
        %v363 = vmul.f32 %v358, %v343
        %364 = vset.pattern.permute.xlu0 2
        %365 = vperm.xlu0 %364, %v201
        %v366 = vpop.permute.xlu0 %365
        %368 = vset.pattern.permute.xlu0 2
        %369 = vperm.xlu0 %368, %v202
        %v370 = vpop.permute.xlu0 %369
        %372 = vset.pattern.permute.xlu0 2
        %373 = vperm.xlu0 %372, %v203
        %v374 = vpop.permute.xlu0 %373
        %376 = vset.pattern.permute.xlu0 2
        %377 = vperm.xlu0 %376, %v204
        %v378 = vpop.permute.xlu0 %377
        %v380 = vadd.f32 %v360, %v366
        %v381 = vadd.f32 %v361, %v370
        %v382 = vadd.f32 %v362, %v374
        %v383 = vadd.f32 %v363, %v378
        %384 = vst.msk [vmem:[%s185] sm:$0xff] %vm297, %v380
        %385 = vst.msk [vmem:[%s185 + $0x8] sm:$0xff] %vm297, %v381
        %386 = vst.msk [vmem:[%s185 + $0x10] sm:$0xff] %vm297, %v382
        %387 = vst.msk [vmem:[%s185 + $0x18] sm:$0xff] %vm297, %v383
        %s388 = sand.u32 %s109, 1
        %s389 = scalar_lea.sflag [#allocation3], %s388
        %s390 = sand.u32 %s109, 1
        %s391 = smul.addr %s390, 32
        %s392 = scalar_lea.vmem [#allocation2], %s391
        // Predicated region
        $region33: #{tpu_custom_call.1} parent=31 // pred_check
          %p393 = pneg %p119
        $region34: #{tpu_custom_call.1} parent=31 // pred_check_branch
          %395 = sbr.rel (%p393) target = $region36
        $region35: #{tpu_custom_call.1} parent=31 // pred_region
          %s397 = ssub.s32 512, 512
          %398 = vsyncadd %s389, %s397
          %s399 = smul.addr %s21, 4
          %s400 = sadd.s32 %s22, %s399
          %s401 = smul.addr %s400, 128
          %s402 = scalar_lea.hbm %s3, %s401
          %s403 = sshll.u32 %s392, 4
          %s404 = int_to_ptr.vmem [resolvable:$true] %s403
          %409 = dma.vmem_to_hbm [thread:$0]  %s404, 512, %s402, %s389, 128, 128, 8
        $region36: #{tpu_custom_call.1} parent=31 // pred_fallthru
          _
      $region32: #{tpu_custom_call.1} parent=5 // pred_fallthru
        _
      %p410 = scmp.le.s32.totalorder 2, %s12
      // Predicated region
      $region37: #{tpu_custom_call.1} parent=5 // pred_check
        %p411 = pneg %p410
      $region38: #{tpu_custom_call.1} parent=5 // pred_check_branch
        %413 = sbr.rel (%p411) target = $region40
      $region39: #{tpu_custom_call.1} parent=5 // pred_region
        %s414 = ssub.s32 %s12, 2
        // Predicated region
        $region41: #{tpu_custom_call.1} parent=39 // pred_check
          %p415 = pneg %p125
        $region42: #{tpu_custom_call.1} parent=39 // pred_check_branch
          %417 = sbr.rel (%p415) target = $region44
        $region43: #{tpu_custom_call.1} parent=39 // pred_region
          %s418 = sand.u32 %s110, 1
          %s419 = scalar_lea.sflag [#allocation3], %s418
          %s420 = sand.u32 %s110, 1
          %s421 = smul.addr %s420, 32
          %s422 = scalar_lea.vmem [#allocation2], %s421
          %423 = dma.done %s419, 512
        $region44: #{tpu_custom_call.1} parent=39 // pred_fallthru
          _
      $region40: #{tpu_custom_call.1} parent=5 // pred_fallthru
        _
    $region6: #{tpu_custom_call.1} parent=1 // loop_footer
      %s16 = sadd.s32 1, %s12
    $region7: #{tpu_custom_call.1} parent=1 // loop_footer_branch
      %11 = sbr.rel target = $region3
    $region8: #{tpu_custom_call.1} parent=1 // loop_exit
      _
    %424 = vsyncpa [#allocation3], 1
    %s425 = scalar_lea.sflag [#allocation3], 1
    %426 = vsyncpa %s425, 1

</llo_original>
